<compile_context>
chip_gen: v7x
topology: tpu7x:2x2x1
jax: 0.10.0
libtpu: 0.0.40
codegen_flags: <defaults>
</compile_context>

<pallas_src>
import jax
import jax.numpy as jnp
from jax.experimental import pallas as pl
from jax.experimental.pallas import tpu as pltpu


def _round_up(x, m):
    return ((x + m - 1) // m) * m


def critic_kernel(s_ref, a_ref, w1s_ref, w1a_ref, b1_ref, w2_ref, b2_ref,
                  w3_ref, b3_ref, o_ref):
    """One batch tile of the critic MLP.

    fc1 is a split matmul (state block + action block) so concat([state,
    action]) never materializes.  fc3 is computed as w3_row @ h2^T so the
    per-tile output is a lane-dense (1, TB) row rather than a (TB, 1) column.
    """
    cdt = w1s_ref.dtype  # MXU input dtype (f32 or bf16); accumulation is f32.

    s = s_ref[...].astype(cdt)
    a = a_ref[...].astype(cdt)
    h1 = (jnp.dot(s, w1s_ref[...], preferred_element_type=jnp.float32)
          + jnp.dot(a, w1a_ref[...], preferred_element_type=jnp.float32)
          + b1_ref[...])
    h1 = jnp.maximum(h1, 0.0)            # bias/ReLU kept f32 (portable to v5e)

    h2 = jnp.dot(h1.astype(cdt), w2_ref[...],
                 preferred_element_type=jnp.float32) + b2_ref[...]
    h2 = jnp.maximum(h2, 0.0)

    # NT contraction -> (8, TB); only row 0 is real (w3 rows 1..7 are zero).
    # TODO(synk): if a bundle dump shows an exposed (TB, hidden) vxpose of h2
    # on the critical path at large hidden, chunk this contraction instead.
    q = jax.lax.dot_general(
        w3_ref[...], h2.astype(cdt),
        dimension_numbers=(((1,), (1,)), ((), ())),
        preferred_element_type=jnp.float32)                       # (8, TB)
    o_ref[...] = (q[0:1, :] + b3_ref[...]).astype(o_ref.dtype)    # (1, TB)


# Conservative per-kernel VMEM ceiling: fits v7x (64 MiB physical, 32 MiB
# default scoped) with headroom; trivially fine on v5e/v6e (128 MiB physical).
_VMEM_BUDGET_BYTES = 28 << 20


def _vmem_bytes_estimate(tb, state_dim, action_dim, hidden, w_itemsize,
                         act_bufs):
    """Lane/sublane-padded VMEM footprint estimate for one batch tile."""
    lane = lambda d: _round_up(max(d, 1), 128)
    sub = lambda d: _round_up(max(d, 1), 8)
    est = 0
    # Streaming activation tiles (f32, lane-padded to 128), multi-buffered.
    est += act_bufs * tb * lane(state_dim) * 4
    est += act_bufs * tb * lane(action_dim) * 4
    # Weights — counted double-buffered even with constant index_maps.
    est += 2 * sub(state_dim) * lane(hidden) * w_itemsize     # w1s
    est += 2 * sub(action_dim) * lane(hidden) * w_itemsize    # w1a
    est += 2 * sub(hidden) * lane(hidden) * w_itemsize        # w2
    est += 2 * 8 * lane(hidden) * w_itemsize                  # w3row
    # Biases (f32).
    est += 2 * 2 * 8 * lane(hidden) * 4 + 2 * 8 * 128 * 4
    # Output block (1, tb) sublane-padded to 8 rows, double-buffered.
    est += 2 * 8 * _round_up(tb, 128) * 4
    # Compiler scratch for h1, h2 and the h2 transpose (f32).
    est += 3 * tb * lane(hidden) * 4
    return est


def critic_forward(state, action, params, *, block_b=1024,
                   compute_dtype=jnp.bfloat16):
    """Pallas implementation of Critic.forward(state, action)."""
    w1, b1, w2, b2, w3, b3 = params
    B, state_dim = state.shape
    action_dim = action.shape[1]
    hidden = w1.shape[1]

    cdt = jnp.dtype(compute_dtype)
    w_isz = cdt.itemsize

    # ---- Batch-tile selection -------------------------------------------
    block_b = max(128, _round_up(block_b, 128))
    if B >= 256:
        # At least two tiles so dimension_semantics=("parallel",) can split
        # the batch across both TensorCores on megacore parts (v7x).
        tb = min(block_b, _round_up(pl.cdiv(B, 2), 128))
        while tb > 128 and _vmem_bytes_estimate(
                tb, state_dim, action_dim, hidden, w_isz,
                3) > _VMEM_BUDGET_BYTES:
            tb -= 128
    else:
        tb = B  # single full-batch tile (block == full array dims)
    num_tiles = pl.cdiv(B, tb)
    act_bufs = 3 if num_tiles >= 3 else 2

    # ---- Kernel-layout parameters (tiny, one-time) ------------------------
    # W1 split by input-feature block, optional bf16 cast for MXU operands,
    # head weight as a zero-padded (8, hidden) row block, biases kept f32.
    w1s = w1[:state_dim, :].astype(cdt)
    w1a = w1[state_dim:, :].astype(cdt)
    w2c = w2.astype(cdt)
    w3row = jnp.zeros((8, hidden), cdt).at[0, :].set(w3[:, 0].astype(cdt))
    b1r = b1.reshape(1, hidden).astype(jnp.float32)
    b2r = b2.reshape(1, hidden).astype(jnp.float32)
    b3r = b3.reshape(1, 1).astype(jnp.float32)

    def const_spec(arr):
        return pl.BlockSpec(arr.shape, lambda i: (0,) * arr.ndim)

    def act_spec(dim):
        idx = lambda i: (i, 0)
        if act_bufs > 2:
            try:
                return pl.BlockSpec((tb, dim), idx,
                                    pipeline_mode=pl.Buffered(act_bufs))
            except (TypeError, AttributeError):
                pass
        return pl.BlockSpec((tb, dim), idx)

    in_specs = [
        act_spec(state_dim),
        act_spec(action_dim),
        const_spec(w1s), const_spec(w1a), const_spec(b1r),
        const_spec(w2c), const_spec(b2r),
        const_spec(w3row), const_spec(b3r),
    ]
    # No wrapper-side padding: a partial last batch block relies on Pallas's
    # non-divisible-block handling; padded-edge rows only feed out-of-range
    # output lanes, which Pallas drops on writeback (batch rows independent).
    out_specs = pl.BlockSpec((1, tb), lambda i: (0, i))
    out_shape = jax.ShapeDtypeStruct((1, B), jnp.float32)

    operands = (state, action, w1s, w1a, b1r, w2c, b2r, w3row, b3r)
    flops = 2 * B * ((state_dim + action_dim) * hidden
                     + hidden * hidden + hidden)
    bytes_accessed = sum(int(x.size) * x.dtype.itemsize for x in operands) \
        + B * 4

    est = _vmem_bytes_estimate(tb, state_dim, action_dim, hidden, w_isz,
                               act_bufs)
    vmem_limit = int(min(max(2 * est + (4 << 20), 32 << 20), 56 << 20))

    out = pl.pallas_call(
        critic_kernel,
        out_shape=out_shape,
        grid=(num_tiles,),
        in_specs=in_specs,
        out_specs=out_specs,
        compiler_params=pltpu.CompilerParams(
            dimension_semantics=("parallel",),
            vmem_limit_bytes=vmem_limit),
        cost_estimate=pl.CostEstimate(
            flops=int(flops), transcendentals=0,
            bytes_accessed=int(bytes_accessed)),
    )(*operands)

    # Lane-dense (1, B) slab back to the module's (B, 1) layout (pure reshape).
    return out.reshape(B, 1)


def init_critic_params(key, state_dim, action_dim, hidden_dim):
    """Deterministic synthetic parameters with the same shapes as the torch module.

    Weights stored as (in_features, out_features) — torch weight transposed —
    biases as (1, out_features).
    """
    d_in = state_dim + action_dim
    k1, k2, k3, k4, k5, k6 = jax.random.split(key, 6)
    scale = 0.1
    w1 = scale * jax.random.normal(k1, (d_in, hidden_dim), jnp.float32)
    b1 = scale * jax.random.normal(k2, (1, hidden_dim), jnp.float32)
    w2 = scale * jax.random.normal(k3, (hidden_dim, hidden_dim), jnp.float32)
    b2 = scale * jax.random.normal(k4, (1, hidden_dim), jnp.float32)
    w3 = scale * jax.random.normal(k5, (hidden_dim, 1), jnp.float32)
    b3 = scale * jax.random.normal(k6, (1, 1), jnp.float32)
    return (w1, b1, w2, b2, w3, b3)


def critic_reference(state, action, params):
    """Pure-JAX reference (mirrors the PyTorch forward)."""
    w1, b1, w2, b2, w3, b3 = params
    x = jnp.concatenate([state, action], axis=1)
    x = jax.nn.relu(x @ w1 + b1)
    x = jax.nn.relu(x @ w2 + b2)
    return x @ w3 + b3


if __name__ == "__main__":
    state_dim, action_dim, hidden_dim, batch = 12, 4, 32, 8

    key = jax.random.PRNGKey(0)
    k_params, k_state, k_action = jax.random.split(key, 3)

    params = init_critic_params(k_params, state_dim, action_dim, hidden_dim)
    state = jax.random.normal(k_state, (batch, state_dim), jnp.float32)
    action = jax.random.normal(k_action, (batch, action_dim), jnp.float32)
    q_ref = critic_reference(state, action, params)

    # Default path: bf16 MXU operands, f32 accumulation, single tile.
    q_bf16 = jax.block_until_ready(critic_forward(state, action, params))
    assert q_bf16.shape == (batch, 1), q_bf16.shape
    assert jnp.allclose(q_bf16, q_ref, atol=5e-2, rtol=5e-2), (q_bf16, q_ref)

    # f32 MXU path, single tile, tight tolerance.
    q_f32 = jax.block_until_ready(
        critic_forward(state, action, params, compute_dtype=jnp.float32))
    assert jnp.allclose(q_f32, q_ref, atol=1e-5, rtol=1e-5), (q_f32, q_ref)

    # Ragged multi-tile grid (B=300, TB=128 -> 3 tiles, partial last block,
    # no wrapper-side padding) with 3-deep buffered activation streams.
    b2 = 300
    s2 = jax.random.normal(jax.random.PRNGKey(1), (b2, state_dim), jnp.float32)
    a2 = jax.random.normal(jax.random.PRNGKey(2), (b2, action_dim), jnp.float32)
    q2_ref = critic_reference(s2, a2, params)
    q2 = jax.block_until_ready(
        critic_forward(s2, a2, params, block_b=128,
                       compute_dtype=jnp.float32))
    assert q2.shape == (b2, 1), q2.shape
    assert jnp.allclose(q2, q2_ref, atol=1e-5, rtol=1e-5)

    # Default block_b with B=300: megacore-aware split (TB=256 -> 2 tiles,
    # partial last block).
    q3 = jax.block_until_ready(
        critic_forward(s2, a2, params, compute_dtype=jnp.float32))
    assert jnp.allclose(q3, q2_ref, atol=1e-5, rtol=1e-5)

    print("KERNEL_OK")
</pallas_src>

<mosaic_0001>
module attributes {stable_mosaic.version = 11 : i64} {
  func.func @critic_kernel(%arg0: i32, %arg1: memref<8x12xf32, #tpu.memory_space<vmem>>, %arg2: memref<8x4xf32, #tpu.memory_space<vmem>>, %arg3: memref<12x32xbf16, #tpu.memory_space<vmem>>, %arg4: memref<4x32xbf16, #tpu.memory_space<vmem>>, %arg5: memref<1x32xf32, #tpu.memory_space<vmem>>, %arg6: memref<32x32xbf16, #tpu.memory_space<vmem>>, %arg7: memref<1x32xf32, #tpu.memory_space<vmem>>, %arg8: memref<8x32xbf16, #tpu.memory_space<vmem>>, %arg9: memref<1x1xf32, #tpu.memory_space<vmem>>, %arg10: memref<1x8xf32, #tpu.memory_space<vmem>>) attributes {dimension_semantics = [#tpu.dimension_semantics<parallel>], iteration_bounds = array<i64: 1>, scalar_prefetch = 0 : i64, scratch_operands = 0 : i64, tpu.core_type = #tpu.core_type<tc>, window_params = [{transform_indices = @transform_0, window_bounds = array<i64: 8, 12>}, {transform_indices = @transform_1, window_bounds = array<i64: 8, 4>}, {pipeline_mode = #tpu.pipeline_mode<synchronous>, transform_indices = @transform_2, window_bounds = array<i64: 12, 32>}, {pipeline_mode = #tpu.pipeline_mode<synchronous>, transform_indices = @transform_3, window_bounds = array<i64: 4, 32>}, {pipeline_mode = #tpu.pipeline_mode<synchronous>, transform_indices = @transform_4, window_bounds = array<i64: 1, 32>}, {pipeline_mode = #tpu.pipeline_mode<synchronous>, transform_indices = @transform_5, window_bounds = array<i64: 32, 32>}, {pipeline_mode = #tpu.pipeline_mode<synchronous>, transform_indices = @transform_6, window_bounds = array<i64: 1, 32>}, {pipeline_mode = #tpu.pipeline_mode<synchronous>, transform_indices = @transform_7, window_bounds = array<i64: 8, 32>}, {pipeline_mode = #tpu.pipeline_mode<synchronous>, transform_indices = @transform_8, window_bounds = array<i64: 1, 1>}, {transform_indices = @transform_9, window_bounds = array<i64: 1, 8>}]} {
    %c0 = arith.constant 0 : index
    %c0_0 = arith.constant 0 : index
    %0 = vector.load %arg1[%c0, %c0_0] : memref<8x12xf32, #tpu.memory_space<vmem>>, vector<8x12xf32>
    %1 = arith.truncf %0 : vector<8x12xf32> to vector<8x12xbf16>
    %c0_1 = arith.constant 0 : index
    %c0_2 = arith.constant 0 : index
    %2 = vector.load %arg2[%c0_1, %c0_2] : memref<8x4xf32, #tpu.memory_space<vmem>>, vector<8x4xf32>
    %3 = arith.truncf %2 : vector<8x4xf32> to vector<8x4xbf16>
    %c0_3 = arith.constant 0 : index
    %c0_4 = arith.constant 0 : index
    %4 = vector.load %arg3[%c0_3, %c0_4] : memref<12x32xbf16, #tpu.memory_space<vmem>>, vector<12x32xbf16>
    %cst = arith.constant dense<0.000000e+00> : vector<8x32xf32>
    %5 = tpu.matmul %1, %4, %cst {dimension_numbers = #tpu.dot_dimension_numbers<[1], [0], [0], [1], [0, 0, 1, 1], [], []>} : vector<8x12xbf16>, vector<12x32xbf16>, vector<8x32xf32> -> vector<8x32xf32>
    %c0_5 = arith.constant 0 : index
    %c0_6 = arith.constant 0 : index
    %6 = vector.load %arg4[%c0_5, %c0_6] : memref<4x32xbf16, #tpu.memory_space<vmem>>, vector<4x32xbf16>
    %cst_7 = arith.constant dense<0.000000e+00> : vector<8x32xf32>
    %7 = tpu.matmul %3, %6, %cst_7 {dimension_numbers = #tpu.dot_dimension_numbers<[1], [0], [0], [1], [0, 0, 1, 1], [], []>} : vector<8x4xbf16>, vector<4x32xbf16>, vector<8x32xf32> -> vector<8x32xf32>
    %8 = arith.addf %5, %7 : vector<8x32xf32>
    %c0_8 = arith.constant 0 : index
    %c0_9 = arith.constant 0 : index
    %9 = vector.load %arg5[%c0_8, %c0_9] : memref<1x32xf32, #tpu.memory_space<vmem>>, vector<1x32xf32>
    %10 = vector.broadcast %9 : vector<1x32xf32> to vector<8x32xf32>
    %11 = arith.addf %8, %10 : vector<8x32xf32>
    %cst_10 = arith.constant 0.000000e+00 : f32
    %12 = vector.broadcast %cst_10 : f32 to vector<8x32xf32>
    %13 = arith.maximumf %11, %12 : vector<8x32xf32>
    %14 = arith.truncf %13 : vector<8x32xf32> to vector<8x32xbf16>
    %c0_11 = arith.constant 0 : index
    %c0_12 = arith.constant 0 : index
    %15 = vector.load %arg6[%c0_11, %c0_12] : memref<32x32xbf16, #tpu.memory_space<vmem>>, vector<32x32xbf16>
    %cst_13 = arith.constant dense<0.000000e+00> : vector<8x32xf32>
    %16 = tpu.matmul %14, %15, %cst_13 {dimension_numbers = #tpu.dot_dimension_numbers<[1], [0], [0], [1], [0, 0, 1, 1], [], []>} : vector<8x32xbf16>, vector<32x32xbf16>, vector<8x32xf32> -> vector<8x32xf32>
    %c0_14 = arith.constant 0 : index
    %c0_15 = arith.constant 0 : index
    %17 = vector.load %arg7[%c0_14, %c0_15] : memref<1x32xf32, #tpu.memory_space<vmem>>, vector<1x32xf32>
    %18 = vector.broadcast %17 : vector<1x32xf32> to vector<8x32xf32>
    %19 = arith.addf %16, %18 : vector<8x32xf32>
    %cst_16 = arith.constant 0.000000e+00 : f32
    %20 = vector.broadcast %cst_16 : f32 to vector<8x32xf32>
    %21 = arith.maximumf %19, %20 : vector<8x32xf32>
    %c0_17 = arith.constant 0 : index
    %c0_18 = arith.constant 0 : index
    %22 = vector.load %arg8[%c0_17, %c0_18] : memref<8x32xbf16, #tpu.memory_space<vmem>>, vector<8x32xbf16>
    %23 = arith.truncf %21 : vector<8x32xf32> to vector<8x32xbf16>
    %cst_19 = arith.constant dense<0.000000e+00> : vector<8x8xf32>
    %24 = tpu.matmul %22, %23, %cst_19 {dimension_numbers = #tpu.dot_dimension_numbers<[1], [1], [0], [0], [0, 0, 1, 0], [], []>} : vector<8x32xbf16>, vector<8x32xbf16>, vector<8x8xf32> -> vector<8x8xf32>
    %25 = vector.extract_strided_slice %24 {offsets = [0, 0], sizes = [1, 8], strides = [1, 1]} : vector<8x8xf32> to vector<1x8xf32>
    %c0_20 = arith.constant 0 : index
    %c0_21 = arith.constant 0 : index
    %26 = vector.load %arg9[%c0_20, %c0_21] : memref<1x1xf32, #tpu.memory_space<vmem>>, vector<1x1xf32>
    %27 = vector.broadcast %26 : vector<1x1xf32> to vector<1x8xf32>
    %28 = arith.addf %25, %27 : vector<1x8xf32>
    %c0_22 = arith.constant 0 : index
    %c0_23 = arith.constant 0 : index
    %29 = vector.load %arg10[%c0_22, %c0_23] : memref<1x8xf32, #tpu.memory_space<vmem>>, vector<1x8xf32>
    tpu.vector_store %arg10[%c0_22, %c0_23], %28 {strides = array<i32>} : memref<1x8xf32, #tpu.memory_space<vmem>>, vector<1x8xf32>,
    return
  }
  func.func @transform_0(%arg0: i32) -> (i32, i32) {
    %c0_i32 = arith.constant 0 : i32
    %c0_i32_0 = arith.constant 0 : i32
    return %arg0, %c0_i32 : i32, i32
  }
  func.func @transform_1(%arg0: i32) -> (i32, i32) {
    %c0_i32 = arith.constant 0 : i32
    %c0_i32_0 = arith.constant 0 : i32
    return %arg0, %c0_i32 : i32, i32
  }
  func.func @transform_2(%arg0: i32) -> (i32, i32) {
    %c0_i32 = arith.constant 0 : i32
    %c0_i32_0 = arith.constant 0 : i32
    %c0_i32_1 = arith.constant 0 : i32
    return %c0_i32, %c0_i32_0 : i32, i32
  }
  func.func @transform_3(%arg0: i32) -> (i32, i32) {
    %c0_i32 = arith.constant 0 : i32
    %c0_i32_0 = arith.constant 0 : i32
    %c0_i32_1 = arith.constant 0 : i32
    return %c0_i32, %c0_i32_0 : i32, i32
  }
  func.func @transform_4(%arg0: i32) -> (i32, i32) {
    %c0_i32 = arith.constant 0 : i32
    %c0_i32_0 = arith.constant 0 : i32
    %c0_i32_1 = arith.constant 0 : i32
    return %c0_i32, %c0_i32_0 : i32, i32
  }
  func.func @transform_5(%arg0: i32) -> (i32, i32) {
    %c0_i32 = arith.constant 0 : i32
    %c0_i32_0 = arith.constant 0 : i32
    %c0_i32_1 = arith.constant 0 : i32
    return %c0_i32, %c0_i32_0 : i32, i32
  }
  func.func @transform_6(%arg0: i32) -> (i32, i32) {
    %c0_i32 = arith.constant 0 : i32
    %c0_i32_0 = arith.constant 0 : i32
    %c0_i32_1 = arith.constant 0 : i32
    return %c0_i32, %c0_i32_0 : i32, i32
  }
  func.func @transform_7(%arg0: i32) -> (i32, i32) {
    %c0_i32 = arith.constant 0 : i32
    %c0_i32_0 = arith.constant 0 : i32
    %c0_i32_1 = arith.constant 0 : i32
    return %c0_i32, %c0_i32_0 : i32, i32
  }
  func.func @transform_8(%arg0: i32) -> (i32, i32) {
    %c0_i32 = arith.constant 0 : i32
    %c0_i32_0 = arith.constant 0 : i32
    %c0_i32_1 = arith.constant 0 : i32
    return %c0_i32, %c0_i32_0 : i32, i32
  }
  func.func @transform_9(%arg0: i32) -> (i32, i32) {
    %c0_i32 = arith.constant 0 : i32
    %c0_i32_0 = arith.constant 0 : i32
    return %c0_i32, %arg0 : i32, i32
  }
}

</mosaic_0001>

<llo_original>
// kernel: tpu_custom_call.1
$region0: #{tpu_custom_call.1}
  #allocation0 [shape = 'u32[]', space=smem, size = 0x4, offset = 0x4, fixed_abs, tag = 'smem constant byte address 0x4 - core index']
  #allocation1 [shape = 'u32[144,128]{1,0:T(1,128)}', space=vmem, size = 0x12000, scoped, tag = 'internal scratch']
  #allocation2 [shape = 'f32[1,1]{1,0:T(1,128)S(1)}', space=vmem, size = 0x200, scoped, tag = 'scoped memory for tpu_custom_call.1']
  %s0 = inlined_call_operand.vmem [shape: f32[8,12], index: 0, kind: input, shape index: {}]
  %s1 = inlined_call_operand.vmem [shape: f32[8,4], index: 1, kind: input, shape index: {}]
  %s2 = inlined_call_operand.hbm [shape: bf16[12,32], index: 2, kind: input, shape index: {}]
  %s3 = inlined_call_operand.vmem [shape: bf16[4,32], index: 3, kind: input, shape index: {}]
  %s4 = inlined_call_operand.hbm [shape: f32[1,32], index: 4, kind: input, shape index: {}]
  %s5 = inlined_call_operand.vmem [shape: bf16[32,32], index: 5, kind: input, shape index: {}]
  %s6 = inlined_call_operand.vmem [shape: f32[1,32], index: 6, kind: input, shape index: {}]
  %s7 = inlined_call_operand.vmem [shape: bf16[8,32], index: 7, kind: input, shape index: {}]
  %s8 = inlined_call_operand.<no memory space> [shape: f32[1,1], index: 8, kind: input, shape index: {}]
  %s9 = inlined_call_operand.hbm [shape: f32[1,8], index: 9, kind: output, shape index: {}]
  %s10 = sld [smem:[#allocation0]]
  $region54: #{tpu_custom_call.1} parent=0
    _
  %s12 = ssub.s32 1, %s10
  %s13 = scalar_select 0, %s12, %s10
  %v14 = vstv %s8
  %15 = vst [vmem:[#allocation2] sm:$0x1] %v14
  $region1: #{tpu_custom_call.1} parent=0
    #allocation3 [shape = 'u8[4096]{0}', space=vmem, size = 0x1000, scoped, tag = 'input window, operand 2, single buffered']
    #allocation4 [shape = 's32[1]{0}', space=sflag, size = 0x4, scoped, tag = 'scoped memory for tpu_custom_call.1']
    #allocation5 [shape = 's32[1]{0}', space=sflag, size = 0x4, scoped, tag = 'scoped memory for tpu_custom_call.1']
    #allocation6 [shape = 'u8[512]{0}', space=vmem, size = 0x400, scoped, tag = 'input window, operand 4, single buffered']
    #allocation7 [shape = 's32[1]{0}', space=sflag, size = 0x4, scoped, tag = 'scoped memory for tpu_custom_call.1']
    #allocation8 [shape = 'u8[512]{0}', space=vmem, size = 0x400, scoped, tag = 'output window, operand 0, single buffered']
    %16 = vsyncpa [#allocation4], 0
    %17 = vsyncpa [#allocation7], 0
    %18 = vsyncpa [#allocation5], 0
    // Predicated region
    $region2: #{tpu_custom_call.1} parent=1 // pred_check
      _
    $region3: #{tpu_custom_call.1} parent=1 // pred_check_branch
      %20 = sbr.rel (0) target = $region5
    $region4: #{tpu_custom_call.1} parent=1 // pred_region
      _
    $region5: #{tpu_custom_call.1} parent=1 // pred_fallthru
      _
    // Predicated region
    $region6: #{tpu_custom_call.1} parent=1 // pred_check
      _
    $region7: #{tpu_custom_call.1} parent=1 // pred_check_branch
      %22 = sbr.rel (0) target = $region9
    $region8: #{tpu_custom_call.1} parent=1 // pred_region
      _
    $region9: #{tpu_custom_call.1} parent=1 // pred_fallthru
      _
    // Predicated region
    $region10: #{tpu_custom_call.1} parent=1 // pred_check
      _
    $region11: #{tpu_custom_call.1} parent=1 // pred_check_branch
      %24 = sbr.rel (0) target = $region13
    $region12: #{tpu_custom_call.1} parent=1 // pred_region
      %s26 = ssub.s32 128, 128
      %27 = vsyncadd [#allocation4], %s26
      %s28 = sshll.u32 [#allocation3], 4
      %s29 = int_to_ptr.vmem [resolvable:$true] %s28
      %34 = dma.hbm_to_vmem [thread:$0]  %s2, 128, %s29, [#allocation4], 64, 64, 4
    $region13: #{tpu_custom_call.1} parent=1 // pred_fallthru
      _
    // Predicated region
    $region14: #{tpu_custom_call.1} parent=1 // pred_check
      _
    $region15: #{tpu_custom_call.1} parent=1 // pred_check_branch
      %36 = sbr.rel (0) target = $region17
    $region16: #{tpu_custom_call.1} parent=1 // pred_region
      _
    $region17: #{tpu_custom_call.1} parent=1 // pred_fallthru
      _
    // Predicated region
    $region18: #{tpu_custom_call.1} parent=1 // pred_check
      _
    $region19: #{tpu_custom_call.1} parent=1 // pred_check_branch
      %38 = sbr.rel (0) target = $region21
    $region20: #{tpu_custom_call.1} parent=1 // pred_region
      %s40 = ssub.s32 16, 16
      %41 = vsyncadd [#allocation7], %s40
      %s43 = sshll.u32 [#allocation6], 4
      %s44 = int_to_ptr.vmem [resolvable:$true] %s43
      %46 = dma.hbm_to_vmem [thread:$0]  %s4, 16, %s44, [#allocation7]
    $region21: #{tpu_custom_call.1} parent=1 // pred_fallthru
      _
    // Predicated region
    $region22: #{tpu_custom_call.1} parent=1 // pred_check
      _
    $region23: #{tpu_custom_call.1} parent=1 // pred_check_branch
      %48 = sbr.rel (0) target = $region25
    $region24: #{tpu_custom_call.1} parent=1 // pred_region
      _
    $region25: #{tpu_custom_call.1} parent=1 // pred_fallthru
      _
    // Predicated region
    $region26: #{tpu_custom_call.1} parent=1 // pred_check
      _
    $region27: #{tpu_custom_call.1} parent=1 // pred_check_branch
      %50 = sbr.rel (0) target = $region29
    $region28: #{tpu_custom_call.1} parent=1 // pred_region
      _
    $region29: #{tpu_custom_call.1} parent=1 // pred_fallthru
      _
    // Predicated region
    $region30: #{tpu_custom_call.1} parent=1 // pred_check
      _
    $region31: #{tpu_custom_call.1} parent=1 // pred_check_branch
      %52 = sbr.rel (0) target = $region33
    $region32: #{tpu_custom_call.1} parent=1 // pred_region
      _
    $region33: #{tpu_custom_call.1} parent=1 // pred_fallthru
      _
    // Predicated region
    $region34: #{tpu_custom_call.1} parent=1 // pred_check
      _
    $region35: #{tpu_custom_call.1} parent=1 // pred_check_branch
      %54 = sbr.rel (0) target = $region37
    $region36: #{tpu_custom_call.1} parent=1 // pred_region
      _
    $region37: #{tpu_custom_call.1} parent=1 // pred_fallthru
      _
    // Predicated region
    $region38: #{tpu_custom_call.1} parent=1 // pred_check
      _
    $region39: #{tpu_custom_call.1} parent=1 // pred_check_branch
      %56 = sbr.rel (0) target = $region41
    $region40: #{tpu_custom_call.1} parent=1 // pred_region
      %57 = dma.done [#allocation4], 128
    $region41: #{tpu_custom_call.1} parent=1 // pred_fallthru
      _
    // Predicated region
    $region42: #{tpu_custom_call.1} parent=1 // pred_check
      _
    $region43: #{tpu_custom_call.1} parent=1 // pred_check_branch
      %59 = sbr.rel (0) target = $region45
    $region44: #{tpu_custom_call.1} parent=1 // pred_region
      %60 = dma.done [#allocation7], 16
    $region45: #{tpu_custom_call.1} parent=1 // pred_fallthru
      _
    %v62 = vld [vmem:[%s0] sm:$0xff]
    %v63 = vpack.c.bf16 %v62, %v62
    %v64 = vld [vmem:[%s1] sm:$0xff]
    %v65 = vpack.c.bf16 %v64, %v64
    %v66 = vld [vmem:[#allocation3] sm:$0xf]
    %v67 = vld [vmem:[#allocation3 + $0x4] sm:$0x3]
    %v68 = vld [vmem:[%s3] sm:$0x3]
    %vm69 = vcmask 31744
    %v71 = vsel %vm69, %v65, 0
    %vm73 = vcmask 1041408
    %v75 = vsel %vm73, %v68, 0
    %77 = vmatprep.subr.bf16.mxu0 0
    %78 = vmatpush1.bf16.msra.mxu0 %v75
    %79 = vmatprep.subr.bf16.mxu0 0
    %80 = vmatpush1.bf16.msra.mxu0 0
    %81 = vmatprep.subr.bf16.mxu0 0
    %82 = vmatpush1.bf16.msra.mxu0 0
    %83 = vmatprep.subr.bf16.mxu0 0
    %84 = vmatpush1.bf16.msra.mxu0 0
    %85 = vmatprep.subr.bf16.mxu0 0
    %86 = vmatpush1.bf16.msra.mxu0 0
    %87 = vmatprep.subr.bf16.mxu0 0
    %88 = vmatpush1.bf16.msra.mxu0 0
    %89 = vmatprep.subr.bf16.mxu0 0
    %90 = vmatpush1.bf16.msra.mxu0 0
    %91 = vmatprep.subr.bf16.mxu0 0
    %92 = vmatpush1.bf16.msra.mxu0 0
    %93 = vmatprep.subr.bf16.mxu0 0
    %94 = vmatpush1.bf16.msra.mxu0 0
    %95 = vmatprep.subr.bf16.mxu0 0
    %96 = vmatpush1.bf16.msra.mxu0 0
    %97 = vmatprep.subr.bf16.mxu0 0
    %98 = vmatpush1.bf16.msra.mxu0 0
    %99 = vmatprep.subr.bf16.mxu0 0
    %100 = vmatpush1.bf16.msra.mxu0 0
    %101 = vmatprep.subr.bf16.mxu0 0
    %102 = vmatpush1.bf16.msra.mxu0 0
    %103 = vmatprep.subr.bf16.mxu0 0
    %104 = vmatpush1.bf16.msra.mxu0 0
    %105 = vmatprep.subr.bf16.mxu0 0
    %106 = vmatpush1.bf16.msra.mxu0 0
    %107 = vmatprep.subr.bf16.mxu0 0
    %108 = vmatpush1.bf16.msra.mxu0 0
    %109 = vmatprep.mubr.bf16.mxu0 0
    %110 = vmatmul.mubr.bf16.gmra.mrb[0].mxu0 %v71
    %v111 = vpop.f32.mrb[0].mxu0
    %v112 = vadd.f32 0.0, %v111
    %v113 = vpop.f32.mrb[0].mxu0
    %v114 = vpop.f32.mrb[0].mxu0
    %v115 = vpop.f32.mrb[0].mxu0
    %116 = vdwg.mxu0
    %v119 = vunpack.c.l.b16 %v66
    %v120 = vunpack.c.l.b16 %v67
    %v121 = vpack.c.b16 %v120, %v119
    %vm122 = vcmask 97280
    %v124 = vsel %vm122, %v63, 0
    %vm126 = vcmask 1045504
    %v128 = vsel %vm126, %v121, 0
    %130 = vmatprep.subr.bf16.mxu0 0
    %131 = vmatpush1.bf16.msra.mxu0 %v128
    %132 = vmatprep.subr.bf16.mxu0 0
    %133 = vmatpush1.bf16.msra.mxu0 0
    %134 = vmatprep.subr.bf16.mxu0 0
    %135 = vmatpush1.bf16.msra.mxu0 0
    %136 = vmatprep.subr.bf16.mxu0 0
    %137 = vmatpush1.bf16.msra.mxu0 0
    %138 = vmatprep.subr.bf16.mxu0 0
    %139 = vmatpush1.bf16.msra.mxu0 0
    %140 = vmatprep.subr.bf16.mxu0 0
    %141 = vmatpush1.bf16.msra.mxu0 0
    %142 = vmatprep.subr.bf16.mxu0 0
    %143 = vmatpush1.bf16.msra.mxu0 0
    %144 = vmatprep.subr.bf16.mxu0 0
    %145 = vmatpush1.bf16.msra.mxu0 0
    %146 = vmatprep.subr.bf16.mxu0 0
    %147 = vmatpush1.bf16.msra.mxu0 0
    %148 = vmatprep.subr.bf16.mxu0 0
    %149 = vmatpush1.bf16.msra.mxu0 0
    %150 = vmatprep.subr.bf16.mxu0 0
    %151 = vmatpush1.bf16.msra.mxu0 0
    %152 = vmatprep.subr.bf16.mxu0 0
    %153 = vmatpush1.bf16.msra.mxu0 0
    %154 = vmatprep.subr.bf16.mxu0 0
    %155 = vmatpush1.bf16.msra.mxu0 0
    %156 = vmatprep.subr.bf16.mxu0 0
    %157 = vmatpush1.bf16.msra.mxu0 0
    %158 = vmatprep.subr.bf16.mxu0 0
    %159 = vmatpush1.bf16.msra.mxu0 0
    %160 = vmatprep.subr.bf16.mxu0 0
    %161 = vmatpush1.bf16.msra.mxu0 0
    %162 = vmatprep.mubr.bf16.mxu0 0
    %163 = vmatmul.mubr.bf16.gmra.mrb[0].mxu0 %v124
    %v164 = vpop.f32.mrb[0].mxu0
    %v165 = vadd.f32 %v112, %v164
    %v166 = vpop.f32.mrb[0].mxu0
    %v167 = vpop.f32.mrb[0].mxu0
    %v168 = vpop.f32.mrb[0].mxu0
    %169 = vdwg.mxu0
    %v170 = vld [vmem:[#allocation6] sm:$0x1]
    %v172 = vlaneseq
    %v173 = vshrl.u32 %v172, 7
    %v174 = vsub.s32 0, %v173
    %v175 = vrot.slane %v170, %v174
    %v177 = vadd.f32 %v165, %v175
    %v178 = vmax.f32 %v177, 0.0
    %v179 = vpack.c.bf16 %v178, %v178
    %v180 = vld [vmem:[%s5] sm:$0xf]
    %v181 = vld [vmem:[%s5 + $0x4] sm:$0xf]
    %v182 = vld [vmem:[%s5 + $0x8] sm:$0xf]
    %v183 = vld [vmem:[%s5 + $0xc] sm:$0xf]
    %v184 = vld [vmem:[%s6] sm:$0x1]
    %v186 = vlaneseq
    %v187 = vshrl.u32 %v186, 7
    %v188 = vsub.s32 0, %v187
    %v189 = vrot.slane %v184, %v188
    %v195 = vunpack.c.l.b16 %v180
    %v196 = vunpack.c.l.b16 %v181
    %v197 = vunpack.c.l.b16 %v182
    %v198 = vunpack.c.l.b16 %v183
    %v199 = vpack.c.b16 %v196, %v195
    %v200 = vpack.c.b16 %v198, %v197
    %vm203 = vcmask 261120
    %v205 = vsel %vm203, %v179, 0
    %207 = vmatprep.subr.bf16.mxu0 0
    %208 = vmatpush1.bf16.msra.mxu0 %v199
    %209 = vmatprep.subr.bf16.mxu0 0
    %210 = vmatpush1.bf16.msra.mxu0 %v200
    %211 = vmatprep.subr.bf16.mxu0 0
    %212 = vmatpush1.bf16.msra.mxu0 0
    %213 = vmatprep.subr.bf16.mxu0 0
    %214 = vmatpush1.bf16.msra.mxu0 0
    %215 = vmatprep.subr.bf16.mxu0 0
    %216 = vmatpush1.bf16.msra.mxu0 0
    %217 = vmatprep.subr.bf16.mxu0 0
    %218 = vmatpush1.bf16.msra.mxu0 0
    %219 = vmatprep.subr.bf16.mxu0 0
    %220 = vmatpush1.bf16.msra.mxu0 0
    %221 = vmatprep.subr.bf16.mxu0 0
    %222 = vmatpush1.bf16.msra.mxu0 0
    %223 = vmatprep.subr.bf16.mxu0 0
    %224 = vmatpush1.bf16.msra.mxu0 0
    %225 = vmatprep.subr.bf16.mxu0 0
    %226 = vmatpush1.bf16.msra.mxu0 0
    %227 = vmatprep.subr.bf16.mxu0 0
    %228 = vmatpush1.bf16.msra.mxu0 0
    %229 = vmatprep.subr.bf16.mxu0 0
    %230 = vmatpush1.bf16.msra.mxu0 0
    %231 = vmatprep.subr.bf16.mxu0 0
    %232 = vmatpush1.bf16.msra.mxu0 0
    %233 = vmatprep.subr.bf16.mxu0 0
    %234 = vmatpush1.bf16.msra.mxu0 0
    %235 = vmatprep.subr.bf16.mxu0 0
    %236 = vmatpush1.bf16.msra.mxu0 0
    %237 = vmatprep.subr.bf16.mxu0 0
    %238 = vmatpush1.bf16.msra.mxu0 0
    %239 = vmatprep.mubr.bf16.mxu0 0
    %240 = vmatmul.mubr.bf16.gmra.mrb[0].mxu0 %v205
    %v241 = vpop.f32.mrb[0].mxu0
    %v242 = vadd.f32 %v189, %v241
    %v243 = vpop.f32.mrb[0].mxu0
    %v244 = vpop.f32.mrb[0].mxu0
    %v245 = vpop.f32.mrb[0].mxu0
    %246 = vdwg.mxu0
    %v247 = vmax.f32 %v242, 0.0
    %v248 = vld [vmem:[%s7] sm:$0xf]
    %v249 = vpack.c.bf16 %v247, %v247
    %v251 = vsel %vm203, %v248, 0
    %v254 = vsel %vm203, %v249, 0
    %256 = vmatprep.subr.bf16.mxu0 0
    %257 = vmatpush1.bf16.xpose.msra.mxu0 %v254
    %258 = vmatprep.subr.bf16.mxu0 0
    %259 = vmatpush1.bf16.xpose.msra.mxu0 0
    %260 = vmatprep.subr.bf16.mxu0 0
    %261 = vmatpush1.bf16.xpose.msra.mxu0 0
    %262 = vmatprep.subr.bf16.mxu0 0
    %263 = vmatpush1.bf16.xpose.msra.mxu0 0
    %264 = vmatprep.subr.bf16.mxu0 0
    %265 = vmatpush1.bf16.xpose.msra.mxu0 0
    %266 = vmatprep.subr.bf16.mxu0 0
    %267 = vmatpush1.bf16.xpose.msra.mxu0 0
    %268 = vmatprep.subr.bf16.mxu0 0
    %269 = vmatpush1.bf16.xpose.msra.mxu0 0
    %270 = vmatprep.subr.bf16.mxu0 0
    %271 = vmatpush1.bf16.xpose.msra.mxu0 0
    %272 = vmatprep.subr.bf16.mxu0 0
    %273 = vmatpush1.bf16.xpose.msra.mxu0 0
    %274 = vmatprep.subr.bf16.mxu0 0
    %275 = vmatpush1.bf16.xpose.msra.mxu0 0
    %276 = vmatprep.subr.bf16.mxu0 0
    %277 = vmatpush1.bf16.xpose.msra.mxu0 0
    %278 = vmatprep.subr.bf16.mxu0 0
    %279 = vmatpush1.bf16.xpose.msra.mxu0 0
    %280 = vmatprep.subr.bf16.mxu0 0
    %281 = vmatpush1.bf16.xpose.msra.mxu0 0
    %282 = vmatprep.subr.bf16.mxu0 0
    %283 = vmatpush1.bf16.xpose.msra.mxu0 0
    %284 = vmatprep.subr.bf16.mxu0 0
    %285 = vmatpush1.bf16.xpose.msra.mxu0 0
    %286 = vmatprep.subr.bf16.mxu0 0
    %287 = vmatpush1.bf16.xpose.msra.mxu0 0
    %288 = vmatprep.mubr.bf16.mxu0 0
    %289 = vmatmul.mubr.bf16.gmra.mrb[0].mxu0 %v251
    %v290 = vpop.f32.mrb[0].mxu0
    %v291 = vadd.f32 0.0, %v290
    %v292 = vpop.f32.mrb[0].mxu0
    %v293 = vpop.f32.mrb[0].mxu0
    %v294 = vpop.f32.mrb[0].mxu0
    %295 = vdwg.mxu0
    %v296 = vld [vmem:[#allocation2] sm:$0x1]
    %298 = vset.pattern.permute.xlu0 0
    %299 = vperm.xlu0 %298, %v296
    %v300 = vpop.permute.xlu0 %299
    %v302 = vlaneseq
    %v303 = vshrl.u32 %v302, 7
    %v304 = vsub.s32 0, %v303
    %v305 = vrot.slane %v300, %v304
    %v306 = vadd.f32 %v291, %v305
    %vm307 = vcmask 57344
    %308 = vst.msk [vmem:[#allocation8] sm:$0x1] %vm307, %v306
    // Predicated region
    $region46: #{tpu_custom_call.1} parent=1 // pred_check
      _
    $region47: #{tpu_custom_call.1} parent=1 // pred_check_branch
      %310 = sbr.rel (0) target = $region49
    $region48: #{tpu_custom_call.1} parent=1 // pred_region
      %s312 = ssub.s32 16, 16
      %313 = vsyncadd [#allocation5], %s312
      %s315 = sshll.u32 [#allocation8], 4
      %s316 = int_to_ptr.vmem [resolvable:$true] %s315
      %318 = dma.vmem_to_hbm [thread:$0]  %s316, 16, %s9, [#allocation5]
    $region49: #{tpu_custom_call.1} parent=1 // pred_fallthru
      _
    // Predicated region
    $region50: #{tpu_custom_call.1} parent=1 // pred_check
      _
    $region51: #{tpu_custom_call.1} parent=1 // pred_check_branch
      %320 = sbr.rel (0) target = $region53
    $region52: #{tpu_custom_call.1} parent=1 // pred_region
      %321 = dma.done [#allocation5], 16
    $region53: #{tpu_custom_call.1} parent=1 // pred_fallthru
      _
    %322 = vsyncpa [#allocation4], 1
    %323 = vsyncpa [#allocation7], 1
    %324 = vsyncpa [#allocation5], 1

</llo_original>
